<compile_context>
chip_gen: v6e
topology: v6e:2x2x1
jax: 0.10.0
libtpu: 0.0.40
codegen_flags: <defaults>
</compile_context>

<pallas_src>
import functools

import jax
import jax.numpy as jnp
from jax.experimental import pallas as pl
from jax.experimental.pallas import tpu as pltpu


def _round_up(a: int, b: int) -> int:
    return (a + b - 1) // b * b


def _vmem_capacity_bytes() -> int:
    try:
        return int(pltpu.get_tpu_info().vmem_capacity_bytes)
    except Exception:
        return 128 << 20  # conservative default (v5e/v6e); v7x reports 64 MiB


def _footprint_bytes(tm: int, ti: int, H: int, isz: int, osz: int) -> int:
    """Single-counted VMEM footprint for one grid step (incl. double buffers)."""
    return (
        2 * tm * H * isz            # x token tile (double buffered)
        + 2 * H * (2 * ti) * isz    # fused [gate|up] weight tile (double buffered)
        + 2 * ti * H * isz          # down weight tile (double buffered)
        + 2 * tm * H * osz          # output tile (double buffered)
        + tm * H * 4                # f32 accumulator scratch
        + tm * (2 * ti) * 4         # f32 gate/up matmul result
        + tm * ti * isz             # bf16 h before the down matmul
        + tm * H * 4                # f32 down matmul result before +=
    )


def _select_tiles(T: int, H: int, I: int, vmem_cap: int, out_itemsize: int,
                  compute_itemsize: int = 2):
    """Pick (tm, ti): keep tm as large as possible (AI ~ tm FLOP/byte), shrink ti first."""
    budget = min(int(0.80 * vmem_cap), 100 << 20)
    # Cap tm so there are >= 2 token tiles when T allows (v7x has 2 TensorCores).
    tm_max = max(16, _round_up(pl.cdiv(T, 2), 16))
    tm_cands = [c for c in (1024, 768, 512, 384, 256, 128, 64, 32, 16) if c <= tm_max] or [16]
    i_eff = _round_up(I, 128)
    ti_cands = [c for c in (512, 384, 256, 128) if c <= i_eff] or [i_eff]
    for tm in tm_cands:          # largest tm first
        for ti in ti_cands:      # shrink ti before giving up tm
            if _footprint_bytes(tm, ti, H, compute_itemsize, out_itemsize) <= budget:
                return tm, ti
    return tm_cands[-1], ti_cands[-1]


def prepare_expert_weights(wg, wu, wd, *, ti: int, compute_dtype=jnp.bfloat16):
    """One-time weight preparation -- keep OUT of the per-call hot path.

    wg, wu: (I, H)  gate_proj / up_proj nn.Linear weights (out_features, in_features)
    wd:     (H, I)  down_proj weight
    Returns:
      wgu_t: (H, 2*I_pad) bf16, tile-interleaved so block k holds
             [gate cols k*ti:(k+1)*ti | up cols k*ti:(k+1)*ti]
      wd_t:  (I_pad, H) bf16 (zero-padded rows contribute nothing)
    """
    I, H = wg.shape
    I_pad = _round_up(I, ti)
    wg_t = jnp.asarray(wg).T.astype(compute_dtype)
    wu_t = jnp.asarray(wu).T.astype(compute_dtype)
    wd_t = jnp.asarray(wd).T.astype(compute_dtype)
    if I_pad != I:
        wg_t = jnp.pad(wg_t, ((0, 0), (0, I_pad - I)))
        wu_t = jnp.pad(wu_t, ((0, 0), (0, I_pad - I)))
        wd_t = jnp.pad(wd_t, ((0, I_pad - I), (0, 0)))
    nk = I_pad // ti
    wgu_t = jnp.stack(
        [wg_t.reshape(H, nk, ti), wu_t.reshape(H, nk, ti)], axis=2
    ).reshape(H, 2 * I_pad)
    return wgu_t, wd_t


def _expert_kernel(x_ref, wgu_ref, wd_ref, o_ref, acc_ref, *, ti: int):
    # x_ref:   (tm, H)      bf16 token tile
    # wgu_ref: (H,  2*ti)   fused [gate|up] weight column tile
    # wd_ref:  (ti, H)      down_proj.weight.T row tile
    # o_ref:   (tm, H)      output tile (resident across the reduction axis)
    # acc_ref: (tm, H)      f32 accumulator scratch
    k = pl.program_id(1)

    @pl.when(k == 0)
    def _init():
        acc_ref[...] = jnp.zeros_like(acc_ref)

    x = x_ref[...]
    # One MXU dot for gate and up together, split at a 128-aligned lane offset.
    gu = jnp.dot(x, wgu_ref[...], preferred_element_type=jnp.float32)  # (tm, 2*ti)
    gate = gu[:, :ti]
    up = gu[:, ti:]
    # SiLU(gate) * up in f32 (VPU/EUP), bf16 cast only for the down matmul.
    h = (gate * jax.nn.sigmoid(gate) * up).astype(wd_ref.dtype)
    acc_ref[...] += jnp.dot(h, wd_ref[...], preferred_element_type=jnp.float32)

    @pl.when(k == pl.num_programs(1) - 1)
    def _finalize():
        o_ref[...] = acc_ref[...].astype(o_ref.dtype)


def expert_forward(x, wgu_t, wd_t, *, tm: int, ti: int, compute_dtype=jnp.bfloat16):
    """Hot-path SwiGLU expert forward.

    x:      (T, H)
    wgu_t:  (H, 2*I_pad)  pre-prepared fused [gate|up] weight (bf16, tile-interleaved)
    wd_t:   (I_pad, H)    pre-prepared down_proj.weight.T (bf16, zero-padded rows)
    """
    T, H = x.shape
    I_pad, H2 = wd_t.shape
    assert H2 == H and wgu_t.shape == (H, 2 * I_pad) and I_pad % ti == 0
    out_dtype = x.dtype

    # Token tile: multiple of 16 (bf16 sublane packing), capped by (padded) T.
    tm = max(16, _round_up(min(tm, _round_up(T, 16)), 16))
    T_pad = _round_up(T, tm)

    xb = x.astype(compute_dtype)
    if T_pad != T:
        xb = jnp.pad(xb, ((0, T_pad - T), (0, 0)))

    grid = (T_pad // tm, I_pad // ti)

    isz = jnp.dtype(compute_dtype).itemsize
    osz = jnp.dtype(out_dtype).itemsize
    footprint = _footprint_bytes(tm, ti, H, isz, osz)
    vmem_cap = _vmem_capacity_bytes()
    cap_limit = min(int(0.875 * vmem_cap), 100 << 20)  # ~56 MiB on v7x, 100 MiB on v5e/v6e
    vmem_limit = int(min(max(int(1.1 * footprint) + (2 << 20), 16 << 20), cap_limit))

    n_tok_tiles = T_pad // tm
    cost = pl.CostEstimate(
        flops=6 * T_pad * H * I_pad,          # three matmuls of 2*T*H*I flops each
        transcendentals=T_pad * I_pad,        # sigmoid inside SiLU
        bytes_accessed=(T_pad * H * isz
                        + n_tok_tiles * 3 * H * I_pad * isz  # weights re-streamed per token tile
                        + T_pad * H * osz),
    )

    kernel = functools.partial(_expert_kernel, ti=ti)

    # If an xprof trace still shows weight-DMA exposure at this tm, consider
    # pipeline_mode=pl.Buffered(3) on the two weight BlockSpecs only.
    out = pl.pallas_call(
        kernel,
        out_shape=jax.ShapeDtypeStruct((T_pad, H), out_dtype),
        grid_spec=pltpu.PrefetchScalarGridSpec(
            num_scalar_prefetch=0,
            grid=grid,
            in_specs=[
                pl.BlockSpec((tm, H), lambda i, k: (i, 0)),        # x token tile
                pl.BlockSpec((H, 2 * ti), lambda i, k: (0, k)),    # fused [gate|up] cols
                pl.BlockSpec((ti, H), lambda i, k: (k, 0)),        # down_proj.T rows
            ],
            out_specs=pl.BlockSpec((tm, H), lambda i, k: (i, 0)),
            scratch_shapes=[pltpu.VMEM((tm, H), jnp.float32)],
        ),
        compiler_params=pltpu.CompilerParams(
            dimension_semantics=("parallel", "arbitrary"),
            vmem_limit_bytes=vmem_limit,
        ),
        cost_estimate=cost,
    )(xb, wgu_t, wd_t)

    return out[:T] if T_pad != T else out


def expert_reference(x, wg, wu, wd):
    # wg, wu: (I, H); wd: (H, I)  -- nn.Linear weight layout (out_features, in_features)
    gate = x @ wg.T
    up = x @ wu.T
    return (jax.nn.silu(gate) * up) @ wd.T


if __name__ == "__main__":
    # Small config consistent with the module: hidden_size=32, intermediate_size=64
    batch, seq, hidden, intermediate = 2, 8, 32, 64

    key = jax.random.PRNGKey(0)
    kx, kg, ku, kd = jax.random.split(key, 4)

    # Activations (batch, seq, hidden) -> flatten to tokens-major 2D
    x3 = jax.random.normal(kx, (batch, seq, hidden), dtype=jnp.float32)
    x = x3.reshape(batch * seq, hidden)

    # nn.Linear weights are (out_features, in_features)
    scale = 0.05
    wg = scale * jax.random.normal(kg, (intermediate, hidden), dtype=jnp.float32)
    wu = scale * jax.random.normal(ku, (intermediate, hidden), dtype=jnp.float32)
    wd = scale * jax.random.normal(kd, (hidden, intermediate), dtype=jnp.float32)

    T = batch * seq
    tm, ti = _select_tiles(T, hidden, intermediate,
                           _vmem_capacity_bytes(), jnp.dtype(jnp.float32).itemsize)

    # One-time weight preparation (cast + transpose + pad + fuse) -- NOT per forward.
    wgu_t, wd_t = prepare_expert_weights(wg, wu, wd, ti=ti)

    out = expert_forward(x, wgu_t, wd_t, tm=tm, ti=ti)
    out = jax.block_until_ready(out)

    ref = expert_reference(x, wg, wu, wd)
    assert out.shape == (T, hidden)
    # bf16 compute path vs f32 reference -> loosened tolerance.
    assert jnp.allclose(out, ref, rtol=3e-2, atol=1e-3), "mismatch vs reference"

    # Reshape back to (batch, seq, hidden) like the PyTorch module would return
    _ = out.reshape(batch, seq, hidden)
    print("KERNEL_OK")
</pallas_src>

<mosaic_0001>
module attributes {stable_mosaic.version = 11 : i64} {
  func.func @_expert_kernel(%arg0: i32, %arg1: i32, %arg2: memref<16x32xbf16, #tpu.memory_space<vmem>>, %arg3: memref<32x256xbf16, #tpu.memory_space<vmem>>, %arg4: memref<128x32xbf16, #tpu.memory_space<vmem>>, %arg5: memref<16x32xf32, #tpu.memory_space<vmem>>, %arg6: memref<16x32xf32, #tpu.memory_space<vmem>>) attributes {dimension_semantics = [#tpu.dimension_semantics<parallel>, #tpu.dimension_semantics<arbitrary>], iteration_bounds = array<i64: 1, 1>, scalar_prefetch = 0 : i64, scratch_operands = 1 : i64, tpu.core_type = #tpu.core_type<tc>, window_params = [{transform_indices = @transform_0, window_bounds = array<i64: 16, 32>}, {transform_indices = @transform_1, window_bounds = array<i64: 32, 256>}, {transform_indices = @transform_2, window_bounds = array<i64: 128, 32>}, {transform_indices = @transform_3, window_bounds = array<i64: 16, 32>}]} {
    %c0_i32 = arith.constant 0 : i32
    %0 = arith.cmpi eq, %arg1, %c0_i32 : i32
    %1 = arith.extui %0 : i1 to i32
    %c0_i32_0 = arith.constant 0 : i32
    %2 = arith.cmpi ne, %1, %c0_i32_0 : i32
    scf.if %2 {
      %cst_14 = arith.constant 0.000000e+00 : f32
      %24 = vector.broadcast %cst_14 : f32 to vector<16x32xf32>
      %c0_15 = arith.constant 0 : index
      %c0_16 = arith.constant 0 : index
      %25 = vector.load %arg6[%c0_15, %c0_16] : memref<16x32xf32, #tpu.memory_space<vmem>>, vector<16x32xf32>
      tpu.vector_store %arg6[%c0_15, %c0_16], %24 {strides = array<i32>} : memref<16x32xf32, #tpu.memory_space<vmem>>, vector<16x32xf32>,
    } else {
    }
    %c0 = arith.constant 0 : index
    %c0_1 = arith.constant 0 : index
    %3 = vector.load %arg2[%c0, %c0_1] : memref<16x32xbf16, #tpu.memory_space<vmem>>, vector<16x32xbf16>
    %c0_2 = arith.constant 0 : index
    %c0_3 = arith.constant 0 : index
    %4 = vector.load %arg3[%c0_2, %c0_3] : memref<32x256xbf16, #tpu.memory_space<vmem>>, vector<32x256xbf16>
    %cst = arith.constant dense<0.000000e+00> : vector<16x256xf32>
    %5 = tpu.matmul %3, %4, %cst {dimension_numbers = #tpu.dot_dimension_numbers<[1], [0], [0], [1], [0, 0, 1, 1], [], []>} : vector<16x32xbf16>, vector<32x256xbf16>, vector<16x256xf32> -> vector<16x256xf32>
    %6 = vector.extract_strided_slice %5 {offsets = [0, 0], sizes = [16, 128], strides = [1, 1]} : vector<16x256xf32> to vector<16x128xf32>
    %7 = vector.extract_strided_slice %5 {offsets = [0, 128], sizes = [16, 128], strides = [1, 1]} : vector<16x256xf32> to vector<16x128xf32>
    %8 = arith.negf %6 : vector<16x128xf32>
    %9 = math.exp %8 : vector<16x128xf32>
    %cst_4 = arith.constant 1.000000e+00 : f32
    %10 = vector.broadcast %cst_4 : f32 to vector<16x128xf32>
    %11 = arith.addf %10, %9 : vector<16x128xf32>
    %12 = arith.divf %10, %11 : vector<16x128xf32>
    %13 = arith.mulf %6, %12 : vector<16x128xf32>
    %14 = arith.mulf %13, %7 : vector<16x128xf32>
    %15 = arith.truncf %14 : vector<16x128xf32> to vector<16x128xbf16>
    %c0_5 = arith.constant 0 : index
    %c0_6 = arith.constant 0 : index
    %16 = vector.load %arg6[%c0_5, %c0_6] : memref<16x32xf32, #tpu.memory_space<vmem>>, vector<16x32xf32>
    %c0_7 = arith.constant 0 : index
    %c0_8 = arith.constant 0 : index
    %17 = vector.load %arg4[%c0_7, %c0_8] : memref<128x32xbf16, #tpu.memory_space<vmem>>, vector<128x32xbf16>
    %cst_9 = arith.constant dense<0.000000e+00> : vector<16x32xf32>
    %18 = tpu.matmul %15, %17, %cst_9 {dimension_numbers = #tpu.dot_dimension_numbers<[1], [0], [0], [1], [0, 0, 1, 1], [], []>} : vector<16x128xbf16>, vector<128x32xbf16>, vector<16x32xf32> -> vector<16x32xf32>
    %19 = arith.addf %16, %18 : vector<16x32xf32>
    %c0_10 = arith.constant 0 : index
    %c0_11 = arith.constant 0 : index
    %20 = vector.load %arg6[%c0_10, %c0_11] : memref<16x32xf32, #tpu.memory_space<vmem>>, vector<16x32xf32>
    tpu.vector_store %arg6[%c0_10, %c0_11], %19 {strides = array<i32>} : memref<16x32xf32, #tpu.memory_space<vmem>>, vector<16x32xf32>,
    %c0_i32_12 = arith.constant 0 : i32
    %21 = arith.cmpi eq, %arg1, %c0_i32_12 : i32
    %22 = arith.extui %21 : i1 to i32
    %c0_i32_13 = arith.constant 0 : i32
    %23 = arith.cmpi ne, %22, %c0_i32_13 : i32
    scf.if %23 {
      %c0_14 = arith.constant 0 : index
      %c0_15 = arith.constant 0 : index
      %24 = vector.load %arg6[%c0_14, %c0_15] : memref<16x32xf32, #tpu.memory_space<vmem>>, vector<16x32xf32>
      %c0_16 = arith.constant 0 : index
      %c0_17 = arith.constant 0 : index
      %25 = vector.load %arg5[%c0_16, %c0_17] : memref<16x32xf32, #tpu.memory_space<vmem>>, vector<16x32xf32>
      tpu.vector_store %arg5[%c0_16, %c0_17], %24 {strides = array<i32>} : memref<16x32xf32, #tpu.memory_space<vmem>>, vector<16x32xf32>,
    } else {
    }
    return
  }
  func.func @transform_0(%arg0: i32, %arg1: i32) -> (i32, i32) {
    %c0_i32 = arith.constant 0 : i32
    %c0_i32_0 = arith.constant 0 : i32
    return %arg0, %c0_i32 : i32, i32
  }
  func.func @transform_1(%arg0: i32, %arg1: i32) -> (i32, i32) {
    %c0_i32 = arith.constant 0 : i32
    %c0_i32_0 = arith.constant 0 : i32
    return %c0_i32, %arg1 : i32, i32
  }
  func.func @transform_2(%arg0: i32, %arg1: i32) -> (i32, i32) {
    %c0_i32 = arith.constant 0 : i32
    %c0_i32_0 = arith.constant 0 : i32
    return %arg1, %c0_i32 : i32, i32
  }
  func.func @transform_3(%arg0: i32, %arg1: i32) -> (i32, i32) {
    %c0_i32 = arith.constant 0 : i32
    %c0_i32_0 = arith.constant 0 : i32
    return %arg0, %c0_i32 : i32, i32
  }
}

</mosaic_0001>

<llo_original>
// kernel: tpu_custom_call.1
$region0: #{tpu_custom_call.1}
  #allocation0 [shape = 'u32[]', space=smem, size = 0x4, offset = 0x4, fixed_abs, tag = 'smem constant byte address 0x4 - core index']
  #allocation1 [shape = 'u32[144,128]{1,0:T(1,128)}', space=vmem, size = 0x12000, scoped, tag = 'internal scratch']
  #allocation2 [shape = 'f32[16,32]{1,0:T(8,128)}', space=vmem, size = 0x2000, scoped, tag = 'scratch operand']
  %s0 = inlined_call_operand.vmem [shape: bf16[16,32], index: 0, kind: input, shape index: {}]
  %s1 = inlined_call_operand.vmem [shape: bf16[32,256], index: 1, kind: input, shape index: {}]
  %s2 = inlined_call_operand.vmem [shape: bf16[128,32], index: 2, kind: input, shape index: {}]
  %s3 = inlined_call_operand.hbm [shape: f32[16,32], index: 3, kind: output, shape index: {}]
  %s4 = sld [smem:[#allocation0]]
  $region30: #{tpu_custom_call.1} parent=0
    _
  %s6 = ssub.s32 1, %s4
  %s7 = scalar_select 0, %s6, %s4
  $region1: #{tpu_custom_call.1} parent=0
    #allocation3 [shape = 'u8[8192]{0}', space=vmem, size = 0x2000, scoped, tag = 'output window, operand 0, single buffered']
    #allocation4 [shape = 's32[1]{0}', space=sflag, size = 0x4, scoped, tag = 'scoped memory for tpu_custom_call.1']
    %8 = vsyncpa [#allocation4], 0
    // Predicated region
    $region2: #{tpu_custom_call.1} parent=1 // pred_check
      _
    $region3: #{tpu_custom_call.1} parent=1 // pred_check_branch
      %10 = sbr.rel (0) target = $region5
    $region4: #{tpu_custom_call.1} parent=1 // pred_region
      _
    $region5: #{tpu_custom_call.1} parent=1 // pred_fallthru
      _
    // Predicated region
    $region6: #{tpu_custom_call.1} parent=1 // pred_check
      _
    $region7: #{tpu_custom_call.1} parent=1 // pred_check_branch
      %12 = sbr.rel (0) target = $region9
    $region8: #{tpu_custom_call.1} parent=1 // pred_region
      _
    $region9: #{tpu_custom_call.1} parent=1 // pred_fallthru
      _
    // Predicated region
    $region10: #{tpu_custom_call.1} parent=1 // pred_check
      _
    $region11: #{tpu_custom_call.1} parent=1 // pred_check_branch
      %14 = sbr.rel (0) target = $region13
    $region12: #{tpu_custom_call.1} parent=1 // pred_region
      _
    $region13: #{tpu_custom_call.1} parent=1 // pred_fallthru
      _
    %p16 = scmp.eq.s32.totalorder 0, 0
    // Predicated region
    $region14: #{tpu_custom_call.1} parent=1 // pred_check
      %p17 = pneg %p16
    $region15: #{tpu_custom_call.1} parent=1 // pred_check_branch
      %19 = sbr.rel (%p17) target = $region17
    $region16: #{tpu_custom_call.1} parent=1 // pred_region
      %vm20 = vcmask 261120
      %21 = vst.msk [vmem:[#allocation2] sm:$0xff] %vm20, 0.0
      %22 = vst.msk [vmem:[#allocation2 + $0x8] sm:$0xff] %vm20, 0.0
    $region17: #{tpu_custom_call.1} parent=1 // pred_fallthru
      _
    %v23 = vld [vmem:[%s0] sm:$0xf]
    %v24 = vld [vmem:[%s0 + $0x4] sm:$0xf]
    %v25 = vld [vmem:[%s1] sm:$0xff]
    %v26 = vld [vmem:[%s1 + $0x8] sm:$0xff]
    %v27 = vld [vmem:[%s1 + $0x10] sm:$0xff]
    %v28 = vld [vmem:[%s1 + $0x18] sm:$0xff]
    %v31 = vunpack.c.l.b16 %v23
    %v32 = vunpack.c.l.b16 %v24
    %v33 = vpack.c.b16 %v32, %v31
    %v38 = vunpack.c.l.b16 %v25
    %v39 = vunpack.c.h.b16 %v25
    %v40 = vunpack.c.l.b16 %v26
    %v41 = vunpack.c.h.b16 %v26
    %v42 = vunpack.c.l.b16 %v27
    %v43 = vunpack.c.h.b16 %v27
    %v44 = vunpack.c.l.b16 %v28
    %v45 = vunpack.c.h.b16 %v28
    %v46 = vpack.c.b16 %v40, %v38
    %v47 = vpack.c.b16 %v41, %v39
    %v48 = vpack.c.b16 %v44, %v42
    %v49 = vpack.c.b16 %v45, %v43
    %vm54 = vcmask 261120
    %v56 = vsel %vm54, %v33, 0
    %58 = vmatprep.subr.bf16.mxu0 0
    %59 = vmatpush1.bf16.msra.mxu0 0
    %60 = vmatprep.subr.bf16.mxu0 0
    %61 = vmatpush1.bf16.msra.mxu0 0
    %62 = vmatprep.subr.bf16.mxu0 0
    %63 = vmatpush1.bf16.msra.mxu0 0
    %64 = vmatprep.subr.bf16.mxu0 0
    %65 = vmatpush1.bf16.msra.mxu0 0
    %66 = vmatprep.subr.bf16.mxu0 0
    %67 = vmatpush1.bf16.msra.mxu0 0
    %68 = vmatprep.subr.bf16.mxu0 0
    %69 = vmatpush1.bf16.msra.mxu0 0
    %70 = vmatprep.subr.bf16.mxu0 %v49
    %71 = vmatpush1.bf16.msra.mxu0 %v48
    %72 = vmatprep.subr.bf16.mxu0 %v47
    %73 = vmatpush1.bf16.msra.mxu0 %v46
    %74 = vmatprep.subr.bf16.mxu0 0
    %75 = vmatpush2.bf16.msra.mxu0 0
    %76 = vmatprep.subr.bf16.mxu0 0
    %77 = vmatpush2.bf16.msra.mxu0 0
    %78 = vmatprep.subr.bf16.mxu0 0
    %79 = vmatpush2.bf16.msra.mxu0 0
    %80 = vmatprep.subr.bf16.mxu0 0
    %81 = vmatpush2.bf16.msra.mxu0 0
    %82 = vmatprep.subr.bf16.mxu0 0
    %83 = vmatpush2.bf16.msra.mxu0 0
    %84 = vmatprep.subr.bf16.mxu0 0
    %85 = vmatpush2.bf16.msra.mxu0 0
    %86 = vmatprep.subr.bf16.mxu0 0
    %87 = vmatpush2.bf16.msra.mxu0 0
    %88 = vmatprep.subr.bf16.mxu0 0
    %89 = vmatpush2.bf16.msra.mxu0 0
    %90 = vmatprep.mubr.bf16.mxu0 0
    %91 = vmatmul.mubr.bf16.gmra.mxu0 %v56
    %v92 = vpop.f32.mrf.mxu0
    %v93 = vadd.f32 0.0, %v92
    %v94 = vpop.f32.mrf.mxu0
    %v95 = vadd.f32 0.0, %v94
    %v96 = vpop.f32.mrf.mxu0
    %v97 = vadd.f32 0.0, %v96
    %v98 = vpop.f32.mrf.mxu0
    %v99 = vadd.f32 0.0, %v98
    %100 = vdwg.mxu0
    %v101 = vxor.u32 %v93, 2147483648
    %v102 = vxor.u32 %v97, 2147483648
    %v103 = vmul.f32 %v101, 1.442695
    %v104 = vpow.pop %v103
    %v105 = vmul.f32 %v102, 1.442695
    %v106 = vpow.pop %v105
    %v107 = vadd.f32 %v104, 1.0
    %v108 = vadd.f32 %v106, 1.0
    %v109 = vrcp.pop %v107
    %v110 = vmul.f32 1.0, %v109
    %v111 = vrcp.pop %v108
    %v112 = vmul.f32 1.0, %v111
    %v113 = vmul.f32 %v93, %v110
    %v114 = vmul.f32 %v97, %v112
    %v115 = vmul.f32 %v113, %v95
    %v116 = vmul.f32 %v114, %v99
    %v117 = vpack.c.bf16 %v116, %v115
    %v118 = vld [vmem:[#allocation2] sm:$0xff]
    %v119 = vld [vmem:[#allocation2 + $0x8] sm:$0xff]
    %v120 = vld [vmem:[%s2] sm:$0xf]
    %v121 = vld [vmem:[%s2 + $0x4] sm:$0xf]
    %v122 = vld [vmem:[%s2 + $0x8] sm:$0xf]
    %v123 = vld [vmem:[%s2 + $0xc] sm:$0xf]
    %v124 = vld [vmem:[%s2 + $0x10] sm:$0xf]
    %v125 = vld [vmem:[%s2 + $0x14] sm:$0xf]
    %v126 = vld [vmem:[%s2 + $0x18] sm:$0xf]
    %v127 = vld [vmem:[%s2 + $0x1c] sm:$0xf]
    %v128 = vld [vmem:[%s2 + $0x20] sm:$0xf]
    %v129 = vld [vmem:[%s2 + $0x24] sm:$0xf]
    %v130 = vld [vmem:[%s2 + $0x28] sm:$0xf]
    %v131 = vld [vmem:[%s2 + $0x2c] sm:$0xf]
    %v132 = vld [vmem:[%s2 + $0x30] sm:$0xf]
    %v133 = vld [vmem:[%s2 + $0x34] sm:$0xf]
    %v134 = vld [vmem:[%s2 + $0x38] sm:$0xf]
    %v135 = vld [vmem:[%s2 + $0x3c] sm:$0xf]
    %v152 = vunpack.c.l.b16 %v120
    %v153 = vunpack.c.l.b16 %v121
    %v154 = vunpack.c.l.b16 %v122
    %v155 = vunpack.c.l.b16 %v123
    %v156 = vunpack.c.l.b16 %v124
    %v157 = vunpack.c.l.b16 %v125
    %v158 = vunpack.c.l.b16 %v126
    %v159 = vunpack.c.l.b16 %v127
    %v160 = vunpack.c.l.b16 %v128
    %v161 = vunpack.c.l.b16 %v129
    %v162 = vunpack.c.l.b16 %v130
    %v163 = vunpack.c.l.b16 %v131
    %v164 = vunpack.c.l.b16 %v132
    %v165 = vunpack.c.l.b16 %v133
    %v166 = vunpack.c.l.b16 %v134
    %v167 = vunpack.c.l.b16 %v135
    %v168 = vpack.c.b16 %v153, %v152
    %v169 = vpack.c.b16 %v155, %v154
    %v170 = vpack.c.b16 %v157, %v156
    %v171 = vpack.c.b16 %v159, %v158
    %v172 = vpack.c.b16 %v161, %v160
    %v173 = vpack.c.b16 %v163, %v162
    %v174 = vpack.c.b16 %v165, %v164
    %v175 = vpack.c.b16 %v167, %v166
    %184 = vmatprep.subr.bf16.mxu0 0
    %185 = vmatpush1.bf16.msra.mxu0 %v175
    %186 = vmatprep.subr.bf16.mxu0 0
    %187 = vmatpush1.bf16.msra.mxu0 %v174
    %188 = vmatprep.subr.bf16.mxu0 0
    %189 = vmatpush1.bf16.msra.mxu0 %v173
    %190 = vmatprep.subr.bf16.mxu0 0
    %191 = vmatpush1.bf16.msra.mxu0 %v172
    %192 = vmatprep.subr.bf16.mxu0 0
    %193 = vmatpush1.bf16.msra.mxu0 %v171
    %194 = vmatprep.subr.bf16.mxu0 0
    %195 = vmatpush1.bf16.msra.mxu0 %v170
    %196 = vmatprep.subr.bf16.mxu0 0
    %197 = vmatpush1.bf16.msra.mxu0 %v169
    %198 = vmatprep.subr.bf16.mxu0 0
    %199 = vmatpush1.bf16.msra.mxu0 %v168
    %200 = vmatprep.subr.bf16.mxu0 0
    %201 = vmatpush2.bf16.msra.mxu0 0
    %202 = vmatprep.subr.bf16.mxu0 0
    %203 = vmatpush2.bf16.msra.mxu0 0
    %204 = vmatprep.subr.bf16.mxu0 0
    %205 = vmatpush2.bf16.msra.mxu0 0
    %206 = vmatprep.subr.bf16.mxu0 0
    %207 = vmatpush2.bf16.msra.mxu0 0
    %208 = vmatprep.subr.bf16.mxu0 0
    %209 = vmatpush2.bf16.msra.mxu0 0
    %210 = vmatprep.subr.bf16.mxu0 0
    %211 = vmatpush2.bf16.msra.mxu0 0
    %212 = vmatprep.subr.bf16.mxu0 0
    %213 = vmatpush2.bf16.msra.mxu0 0
    %214 = vmatprep.subr.bf16.mxu0 0
    %215 = vmatpush2.bf16.msra.mxu0 0
    %216 = vmatprep.mubr.bf16.mxu0 0
    %217 = vmatmul.mubr.bf16.gmra.mxu0 %v117
    %v218 = vpop.f32.mrf.mxu0
    %v219 = vadd.f32 0.0, %v218
    %v220 = vpop.f32.mrf.mxu0
    %v221 = vpop.f32.mrf.mxu0
    %v222 = vadd.f32 0.0, %v221
    %v223 = vpop.f32.mrf.mxu0
    %224 = vdwg.mxu0
    %v225 = vadd.f32 %v118, %v219
    %v226 = vadd.f32 %v119, %v222
    %227 = vst.msk [vmem:[#allocation2] sm:$0xff] %vm54, %v225
    %228 = vst.msk [vmem:[#allocation2 + $0x8] sm:$0xff] %vm54, %v226
    // Predicated region
    $region18: #{tpu_custom_call.1} parent=1 // pred_check
      %p229 = pneg %p16
    $region19: #{tpu_custom_call.1} parent=1 // pred_check_branch
      %231 = sbr.rel (%p229) target = $region21
    $region20: #{tpu_custom_call.1} parent=1 // pred_region
      %v232 = vld [vmem:[#allocation2] sm:$0xff]
      %v233 = vld [vmem:[#allocation2 + $0x8] sm:$0xff]
      %234 = vst.msk [vmem:[#allocation3] sm:$0xff] %vm54, %v232
      %235 = vst.msk [vmem:[#allocation3 + $0x8] sm:$0xff] %vm54, %v233
    $region21: #{tpu_custom_call.1} parent=1 // pred_fallthru
      _
    // Predicated region
    $region22: #{tpu_custom_call.1} parent=1 // pred_check
      _
    $region23: #{tpu_custom_call.1} parent=1 // pred_check_branch
      %237 = sbr.rel (0) target = $region25
    $region24: #{tpu_custom_call.1} parent=1 // pred_region
      %s239 = ssub.s32 256, 256
      %240 = vsyncadd [#allocation4], %s239
      %s241 = sshll.u32 [#allocation3], 4
      %s242 = int_to_ptr.vmem [resolvable:$true] %s241
      %247 = dma.vmem_to_hbm [thread:$0]  %s242, 256, %s3, [#allocation4], 128, 128, 8
    $region25: #{tpu_custom_call.1} parent=1 // pred_fallthru
      _
    // Predicated region
    $region26: #{tpu_custom_call.1} parent=1 // pred_check
      _
    $region27: #{tpu_custom_call.1} parent=1 // pred_check_branch
      %249 = sbr.rel (0) target = $region29
    $region28: #{tpu_custom_call.1} parent=1 // pred_region
      %250 = dma.done [#allocation4], 256
    $region29: #{tpu_custom_call.1} parent=1 // pred_fallthru
      _
    %251 = vsyncpa [#allocation4], 1

</llo_original>
